<compile_context>
chip_gen: v6e
topology: v6e:2x2x1
jax: 0.10.0
libtpu: 0.0.40
codegen_flags: <defaults>
</compile_context>

<pallas_src>
import jax
import jax.numpy as jnp
from jax.experimental import pallas as pl
from jax.experimental.pallas import tpu as pltpu


def _round_up(x, m):
    return (x + m - 1) // m * m


def _make_gather_kernel(tb, tc, depth, table_in_vmem):
    """Gather `tb` table rows into the (tb, tc) output block, keeping `depth`
    row DMAs in flight through a semaphore ring."""

    def kernel(idx_ref, table_ref, out_ref, sems):
        # idx_ref   : SMEM int32 [padded_batch]   (scalar prefetch)
        # table_ref : VMEM (datasize, tc) block   (small-table path)
        #             or raw HBM ref (datasize, cpad2) (pl.ANY path)
        # out_ref   : VMEM (tb, tc) output block
        # sems      : DMA semaphore ring, shape (depth,)
        i = pl.program_id(0)
        base = i * tb
        if table_in_vmem:
            col = 0  # BlockSpec already selected the class chunk
        else:
            col = pl.multiple_of(pl.program_id(1) * tc, 128)

        def row_copy(j):
            row = idx_ref[base + j]
            return pltpu.make_async_copy(
                table_ref.at[pl.ds(row, 1), pl.ds(col, tc)],
                out_ref.at[pl.ds(j, 1), :],
                sems.at[j % depth],
            )

        def row_wait(j):
            # Dummy source window of identical shape: the wait only needs the
            # semaphore and the expected byte count.
            pltpu.make_async_copy(
                table_ref.at[pl.ds(0, 1), pl.ds(col, tc)],
                out_ref.at[pl.ds(j, 1), :],
                sems.at[j % depth],
            ).wait()

        # Prime `depth` row gathers (static, tiny loop).
        for j in range(depth):
            row_copy(j).start()

        # Steady state: retire row j, immediately launch row j + depth into
        # the semaphore slot that just freed.
        def steady(j, carry):
            row_wait(j)
            row_copy(j + depth).start()
            return carry

        jax.lax.fori_loop(0, tb - depth, steady, 0)

        # Drain the last `depth` in-flight gathers.
        def drain(j, carry):
            row_wait(j)
            return carry

        jax.lax.fori_loop(tb - depth, tb, drain, 0)

    return kernel


def deep_decipher_forward(index, pseudo_label, *, tile_batch=128,
                          tile_class=None, small_table_bytes=2 * 1024 * 1024,
                          dma_depth=8):
    """Pallas equivalent of DeepDecipher.forward(index).

    index:        int   [batch]
    pseudo_label: float [datasize, class_num]
    returns:      float [batch, class_num]  ( == pseudo_label[index, :] )
    """
    batch = int(index.shape[0])
    datasize, class_num = pseudo_label.shape
    dtype = pseudo_label.dtype
    itemsize = jnp.dtype(dtype).itemsize
    pack = max(8, 32 // itemsize)            # sublane pack: 8 f32 / 16 bf16 / 32 i8

    # ---- lane-align the class axis ----------------------------------------
    cpad = _round_up(class_num, 128)

    # ---- path + budget selection -------------------------------------------
    table_bytes = datasize * cpad * itemsize
    table_in_vmem = table_bytes <= small_table_bytes
    # Per-block byte budget (x2 pipeline buffering is accounted for by keeping
    # these well under the 32 MiB scoped limit set below).
    blk_budget = (2 * 1024 * 1024) if table_in_vmem else (4 * 1024 * 1024)

    # Class-axis chunk: only chunk when even `pack` rows would not fit.
    max_tc = max(128, (blk_budget // (pack * itemsize)) // 128 * 128)
    tc = min(cpad, max_tc)
    if tile_class is not None:
        tc = min(tc, _round_up(int(tile_class), 128))
    cpad2 = _round_up(cpad, tc)
    n_cc = cpad2 // tc

    # Batch tile: pack-aligned, budget-capped.
    b_pack = _round_up(batch, pack)
    max_tb = max(pack, (blk_budget // (tc * itemsize)) // pack * pack)
    tb = min(_round_up(tile_batch, pack), max_tb, b_pack)
    if tb >= b_pack and b_pack > pack:
        # Small batch: split into >=2 outer tiles so v7x's two TCs both work.
        tb = _round_up((b_pack + 1) // 2, pack)
    padded_batch = _round_up(b_pack, tb)

    depth = max(1, min(int(dma_depth), tb))

    # ---- pad inputs ---------------------------------------------------------
    if cpad2 != class_num:
        pseudo_label = jnp.pad(pseudo_label, ((0, 0), (0, cpad2 - class_num)))
    idx = jnp.clip(index.astype(jnp.int32), 0, datasize - 1)
    if padded_batch != batch:
        idx = jnp.pad(idx, (0, padded_batch - batch))   # pad rows gather row 0

    # ---- specs --------------------------------------------------------------
    if table_in_vmem:
        # Whole table (one class chunk) resident in VMEM: HBM read once,
        # gathers become local VMEM->VMEM row DMAs.
        table_spec = pl.BlockSpec((datasize, tc), lambda i, c, idx_ref: (0, c))
    else:
        # Large table stays in HBM; rows are gathered HBM->VMEM on demand.
        table_spec = pl.BlockSpec(memory_space=pl.ANY)

    kernel = _make_gather_kernel(tb=tb, tc=tc, depth=depth,
                                 table_in_vmem=table_in_vmem)

    grid_spec = pltpu.PrefetchScalarGridSpec(
        num_scalar_prefetch=1,                 # idx lives in SMEM
        grid=(padded_batch // tb, n_cc),
        in_specs=[table_spec],
        out_specs=pl.BlockSpec((tb, tc), lambda i, c, idx_ref: (i, c)),
        scratch_shapes=[pltpu.SemaphoreType.DMA((depth,))],
    )

    out = pl.pallas_call(
        kernel,
        grid_spec=grid_spec,
        out_shape=jax.ShapeDtypeStruct((padded_batch, cpad2), dtype),
        compiler_params=pltpu.CompilerParams(
            dimension_semantics=("parallel", "arbitrary"),
            vmem_limit_bytes=32 * 1024 * 1024,   # safe on v5e/v6e/v7x
        ),
    )(idx, pseudo_label)

    return out[:batch, :class_num]


if __name__ == "__main__":
    key = jax.random.PRNGKey(0)

    def _check(out, index, pseudo_label, name):
        ref = jnp.take(pseudo_label, index, axis=0)
        assert out.shape == ref.shape and out.dtype == ref.dtype, name
        assert jnp.array_equal(out, ref), f"mismatch vs reference gather ({name})"

    # --- case 1: aligned shapes, small table -> VMEM-resident fast path -----
    datasize, class_num, batch = 64, 128, 16
    k_pl, k_idx, key = jax.random.split(key, 3)
    pseudo_label = jax.random.normal(k_pl, (datasize, class_num), dtype=jnp.float32)
    index = jax.random.randint(k_idx, (batch,), 0, datasize, dtype=jnp.int32)
    out = jax.block_until_ready(deep_decipher_forward(index, pseudo_label))
    _check(out, index, pseudo_label, "vmem path, aligned")

    # --- case 2: ragged shapes (class_num=10, batch not multiple of 8) ------
    datasize2, class_num2, batch2 = 37, 10, 6
    k_pl2, k_idx2, key = jax.random.split(key, 3)
    pseudo_label2 = jax.random.normal(k_pl2, (datasize2, class_num2), dtype=jnp.float32)
    index2 = jax.random.randint(k_idx2, (batch2,), 0, datasize2, dtype=jnp.int32)
    out2 = jax.block_until_ready(deep_decipher_forward(index2, pseudo_label2))
    _check(out2, index2, pseudo_label2, "vmem path, ragged")

    # --- case 3: force the HBM manual-DMA gather path ------------------------
    out3 = jax.block_until_ready(
        deep_decipher_forward(index, pseudo_label, small_table_bytes=0))
    _check(out3, index, pseudo_label, "hbm path, aligned")

    # --- case 4: HBM path with class-axis chunking (n_cc > 1) ----------------
    datasize4, class_num4, batch4 = 40, 300, 10
    k_pl4, k_idx4, key = jax.random.split(key, 3)
    pseudo_label4 = jax.random.normal(k_pl4, (datasize4, class_num4), dtype=jnp.float32)
    index4 = jax.random.randint(k_idx4, (batch4,), 0, datasize4, dtype=jnp.int32)
    out4 = jax.block_until_ready(
        deep_decipher_forward(index4, pseudo_label4,
                              small_table_bytes=0, tile_class=128))
    _check(out4, index4, pseudo_label4, "hbm path, class chunks")

    # --- case 5: VMEM path with class-axis chunking ---------------------------
    out5 = jax.block_until_ready(
        deep_decipher_forward(index4, pseudo_label4, tile_class=128))
    _check(out5, index4, pseudo_label4, "vmem path, class chunks")

    print("KERNEL_OK")
</pallas_src>

<mosaic_0001>
module attributes {stable_mosaic.version = 11 : i64} {
  func.func @kernel(%arg0: i32, %arg1: i32, %arg2: memref<16xi32, #tpu.memory_space<smem>>, %arg3: memref<64x128xf32, #tpu.memory_space<vmem>>, %arg4: memref<8x128xf32, #tpu.memory_space<vmem>>, %arg5: memref<8x!tpu.dma_semaphore, #tpu.memory_space<semaphore_mem>>) attributes {dimension_semantics = [#tpu.dimension_semantics<parallel>, #tpu.dimension_semantics<arbitrary>], iteration_bounds = array<i64: 2, 1>, scalar_prefetch = 1 : i64, scratch_operands = 1 : i64, tpu.core_type = #tpu.core_type<tc>, window_params = [{transform_indices = @transform_0, window_bounds = array<i64: 64, 128>}, {transform_indices = @transform_1, window_bounds = array<i64: 8, 128>}]} {
    %c8_i32 = arith.constant 8 : i32
    %0 = arith.muli %arg0, %c8_i32 : i32
    %c0_i32 = arith.constant 0 : i32
    %1 = arith.addi %0, %c0_i32 : i32
    %2 = arith.index_cast %1 : i32 to index
    %3 = memref.load %arg2[%2] : memref<16xi32, #tpu.memory_space<smem>>
    %c0_i32_0 = arith.constant 0 : i32
    %c0_i32_1 = arith.constant 0 : i32
    %4 = tpu.memref_slice %arg3[%3, %c0_i32_1] : memref<64x128xf32, #tpu.memory_space<vmem>> -> memref<1x128xf32, #tpu.memory_space<vmem>>
    %c0_i32_2 = arith.constant 0 : i32
    %c0_i32_3 = arith.constant 0 : i32
    %5 = tpu.memref_slice %arg4[%c0_i32_2, %c0_i32_3] : memref<8x128xf32, #tpu.memory_space<vmem>> -> memref<1x128xf32, #tpu.memory_space<vmem>>
    %6 = tpu.memref_slice %arg5[%c0_i32_0] : memref<8x!tpu.dma_semaphore, #tpu.memory_space<semaphore_mem>> -> memref<1x!tpu.dma_semaphore, #tpu.memory_space<semaphore_mem>>
    %7 = tpu.memref_squeeze %6 : memref<1x!tpu.dma_semaphore, #tpu.memory_space<semaphore_mem>> -> memref<!tpu.dma_semaphore, #tpu.memory_space<semaphore_mem>>
    tpu.enqueue_dma source(%4 : memref<1x128xf32, #tpu.memory_space<vmem>>) target(%5 : memref<1x128xf32, #tpu.memory_space<vmem>>) target_semaphore(%7 : memref<!tpu.dma_semaphore, #tpu.memory_space<semaphore_mem>>)
    %c1_i32 = arith.constant 1 : i32
    %8 = arith.addi %0, %c1_i32 : i32
    %9 = arith.index_cast %8 : i32 to index
    %10 = memref.load %arg2[%9] : memref<16xi32, #tpu.memory_space<smem>>
    %c1_i32_4 = arith.constant 1 : i32
    %c0_i32_5 = arith.constant 0 : i32
    %11 = tpu.memref_slice %arg3[%10, %c0_i32_5] : memref<64x128xf32, #tpu.memory_space<vmem>> -> memref<1x128xf32, #tpu.memory_space<vmem>>
    %c1_i32_6 = arith.constant 1 : i32
    %c0_i32_7 = arith.constant 0 : i32
    %12 = tpu.memref_slice %arg4[%c1_i32_6, %c0_i32_7] : memref<8x128xf32, #tpu.memory_space<vmem>> -> memref<1x128xf32, #tpu.memory_space<vmem>>
    %13 = tpu.memref_slice %arg5[%c1_i32_4] : memref<8x!tpu.dma_semaphore, #tpu.memory_space<semaphore_mem>> -> memref<1x!tpu.dma_semaphore, #tpu.memory_space<semaphore_mem>>
    %14 = tpu.memref_squeeze %13 : memref<1x!tpu.dma_semaphore, #tpu.memory_space<semaphore_mem>> -> memref<!tpu.dma_semaphore, #tpu.memory_space<semaphore_mem>>
    tpu.enqueue_dma source(%11 : memref<1x128xf32, #tpu.memory_space<vmem>>) target(%12 : memref<1x128xf32, #tpu.memory_space<vmem>>) target_semaphore(%14 : memref<!tpu.dma_semaphore, #tpu.memory_space<semaphore_mem>>)
    %c2_i32 = arith.constant 2 : i32
    %15 = arith.addi %0, %c2_i32 : i32
    %16 = arith.index_cast %15 : i32 to index
    %17 = memref.load %arg2[%16] : memref<16xi32, #tpu.memory_space<smem>>
    %c2_i32_8 = arith.constant 2 : i32
    %c0_i32_9 = arith.constant 0 : i32
    %18 = tpu.memref_slice %arg3[%17, %c0_i32_9] : memref<64x128xf32, #tpu.memory_space<vmem>> -> memref<1x128xf32, #tpu.memory_space<vmem>>
    %c2_i32_10 = arith.constant 2 : i32
    %c0_i32_11 = arith.constant 0 : i32
    %19 = tpu.memref_slice %arg4[%c2_i32_10, %c0_i32_11] : memref<8x128xf32, #tpu.memory_space<vmem>> -> memref<1x128xf32, #tpu.memory_space<vmem>>
    %20 = tpu.memref_slice %arg5[%c2_i32_8] : memref<8x!tpu.dma_semaphore, #tpu.memory_space<semaphore_mem>> -> memref<1x!tpu.dma_semaphore, #tpu.memory_space<semaphore_mem>>
    %21 = tpu.memref_squeeze %20 : memref<1x!tpu.dma_semaphore, #tpu.memory_space<semaphore_mem>> -> memref<!tpu.dma_semaphore, #tpu.memory_space<semaphore_mem>>
    tpu.enqueue_dma source(%18 : memref<1x128xf32, #tpu.memory_space<vmem>>) target(%19 : memref<1x128xf32, #tpu.memory_space<vmem>>) target_semaphore(%21 : memref<!tpu.dma_semaphore, #tpu.memory_space<semaphore_mem>>)
    %c3_i32 = arith.constant 3 : i32
    %22 = arith.addi %0, %c3_i32 : i32
    %23 = arith.index_cast %22 : i32 to index
    %24 = memref.load %arg2[%23] : memref<16xi32, #tpu.memory_space<smem>>
    %c3_i32_12 = arith.constant 3 : i32
    %c0_i32_13 = arith.constant 0 : i32
    %25 = tpu.memref_slice %arg3[%24, %c0_i32_13] : memref<64x128xf32, #tpu.memory_space<vmem>> -> memref<1x128xf32, #tpu.memory_space<vmem>>
    %c3_i32_14 = arith.constant 3 : i32
    %c0_i32_15 = arith.constant 0 : i32
    %26 = tpu.memref_slice %arg4[%c3_i32_14, %c0_i32_15] : memref<8x128xf32, #tpu.memory_space<vmem>> -> memref<1x128xf32, #tpu.memory_space<vmem>>
    %27 = tpu.memref_slice %arg5[%c3_i32_12] : memref<8x!tpu.dma_semaphore, #tpu.memory_space<semaphore_mem>> -> memref<1x!tpu.dma_semaphore, #tpu.memory_space<semaphore_mem>>
    %28 = tpu.memref_squeeze %27 : memref<1x!tpu.dma_semaphore, #tpu.memory_space<semaphore_mem>> -> memref<!tpu.dma_semaphore, #tpu.memory_space<semaphore_mem>>
    tpu.enqueue_dma source(%25 : memref<1x128xf32, #tpu.memory_space<vmem>>) target(%26 : memref<1x128xf32, #tpu.memory_space<vmem>>) target_semaphore(%28 : memref<!tpu.dma_semaphore, #tpu.memory_space<semaphore_mem>>)
    %c4_i32 = arith.constant 4 : i32
    %29 = arith.addi %0, %c4_i32 : i32
    %30 = arith.index_cast %29 : i32 to index
    %31 = memref.load %arg2[%30] : memref<16xi32, #tpu.memory_space<smem>>
    %c4_i32_16 = arith.constant 4 : i32
    %c0_i32_17 = arith.constant 0 : i32
    %32 = tpu.memref_slice %arg3[%31, %c0_i32_17] : memref<64x128xf32, #tpu.memory_space<vmem>> -> memref<1x128xf32, #tpu.memory_space<vmem>>
    %c4_i32_18 = arith.constant 4 : i32
    %c0_i32_19 = arith.constant 0 : i32
    %33 = tpu.memref_slice %arg4[%c4_i32_18, %c0_i32_19] : memref<8x128xf32, #tpu.memory_space<vmem>> -> memref<1x128xf32, #tpu.memory_space<vmem>>
    %34 = tpu.memref_slice %arg5[%c4_i32_16] : memref<8x!tpu.dma_semaphore, #tpu.memory_space<semaphore_mem>> -> memref<1x!tpu.dma_semaphore, #tpu.memory_space<semaphore_mem>>
    %35 = tpu.memref_squeeze %34 : memref<1x!tpu.dma_semaphore, #tpu.memory_space<semaphore_mem>> -> memref<!tpu.dma_semaphore, #tpu.memory_space<semaphore_mem>>
    tpu.enqueue_dma source(%32 : memref<1x128xf32, #tpu.memory_space<vmem>>) target(%33 : memref<1x128xf32, #tpu.memory_space<vmem>>) target_semaphore(%35 : memref<!tpu.dma_semaphore, #tpu.memory_space<semaphore_mem>>)
    %c5_i32 = arith.constant 5 : i32
    %36 = arith.addi %0, %c5_i32 : i32
    %37 = arith.index_cast %36 : i32 to index
    %38 = memref.load %arg2[%37] : memref<16xi32, #tpu.memory_space<smem>>
    %c5_i32_20 = arith.constant 5 : i32
    %c0_i32_21 = arith.constant 0 : i32
    %39 = tpu.memref_slice %arg3[%38, %c0_i32_21] : memref<64x128xf32, #tpu.memory_space<vmem>> -> memref<1x128xf32, #tpu.memory_space<vmem>>
    %c5_i32_22 = arith.constant 5 : i32
    %c0_i32_23 = arith.constant 0 : i32
    %40 = tpu.memref_slice %arg4[%c5_i32_22, %c0_i32_23] : memref<8x128xf32, #tpu.memory_space<vmem>> -> memref<1x128xf32, #tpu.memory_space<vmem>>
    %41 = tpu.memref_slice %arg5[%c5_i32_20] : memref<8x!tpu.dma_semaphore, #tpu.memory_space<semaphore_mem>> -> memref<1x!tpu.dma_semaphore, #tpu.memory_space<semaphore_mem>>
    %42 = tpu.memref_squeeze %41 : memref<1x!tpu.dma_semaphore, #tpu.memory_space<semaphore_mem>> -> memref<!tpu.dma_semaphore, #tpu.memory_space<semaphore_mem>>
    tpu.enqueue_dma source(%39 : memref<1x128xf32, #tpu.memory_space<vmem>>) target(%40 : memref<1x128xf32, #tpu.memory_space<vmem>>) target_semaphore(%42 : memref<!tpu.dma_semaphore, #tpu.memory_space<semaphore_mem>>)
    %c6_i32 = arith.constant 6 : i32
    %43 = arith.addi %0, %c6_i32 : i32
    %44 = arith.index_cast %43 : i32 to index
    %45 = memref.load %arg2[%44] : memref<16xi32, #tpu.memory_space<smem>>
    %c6_i32_24 = arith.constant 6 : i32
    %c0_i32_25 = arith.constant 0 : i32
    %46 = tpu.memref_slice %arg3[%45, %c0_i32_25] : memref<64x128xf32, #tpu.memory_space<vmem>> -> memref<1x128xf32, #tpu.memory_space<vmem>>
    %c6_i32_26 = arith.constant 6 : i32
    %c0_i32_27 = arith.constant 0 : i32
    %47 = tpu.memref_slice %arg4[%c6_i32_26, %c0_i32_27] : memref<8x128xf32, #tpu.memory_space<vmem>> -> memref<1x128xf32, #tpu.memory_space<vmem>>
    %48 = tpu.memref_slice %arg5[%c6_i32_24] : memref<8x!tpu.dma_semaphore, #tpu.memory_space<semaphore_mem>> -> memref<1x!tpu.dma_semaphore, #tpu.memory_space<semaphore_mem>>
    %49 = tpu.memref_squeeze %48 : memref<1x!tpu.dma_semaphore, #tpu.memory_space<semaphore_mem>> -> memref<!tpu.dma_semaphore, #tpu.memory_space<semaphore_mem>>
    tpu.enqueue_dma source(%46 : memref<1x128xf32, #tpu.memory_space<vmem>>) target(%47 : memref<1x128xf32, #tpu.memory_space<vmem>>) target_semaphore(%49 : memref<!tpu.dma_semaphore, #tpu.memory_space<semaphore_mem>>)
    %c7_i32 = arith.constant 7 : i32
    %50 = arith.addi %0, %c7_i32 : i32
    %51 = arith.index_cast %50 : i32 to index
    %52 = memref.load %arg2[%51] : memref<16xi32, #tpu.memory_space<smem>>
    %c7_i32_28 = arith.constant 7 : i32
    %c0_i32_29 = arith.constant 0 : i32
    %53 = tpu.memref_slice %arg3[%52, %c0_i32_29] : memref<64x128xf32, #tpu.memory_space<vmem>> -> memref<1x128xf32, #tpu.memory_space<vmem>>
    %c7_i32_30 = arith.constant 7 : i32
    %c0_i32_31 = arith.constant 0 : i32
    %54 = tpu.memref_slice %arg4[%c7_i32_30, %c0_i32_31] : memref<8x128xf32, #tpu.memory_space<vmem>> -> memref<1x128xf32, #tpu.memory_space<vmem>>
    %55 = tpu.memref_slice %arg5[%c7_i32_28] : memref<8x!tpu.dma_semaphore, #tpu.memory_space<semaphore_mem>> -> memref<1x!tpu.dma_semaphore, #tpu.memory_space<semaphore_mem>>
    %56 = tpu.memref_squeeze %55 : memref<1x!tpu.dma_semaphore, #tpu.memory_space<semaphore_mem>> -> memref<!tpu.dma_semaphore, #tpu.memory_space<semaphore_mem>>
    tpu.enqueue_dma source(%53 : memref<1x128xf32, #tpu.memory_space<vmem>>) target(%54 : memref<1x128xf32, #tpu.memory_space<vmem>>) target_semaphore(%56 : memref<!tpu.dma_semaphore, #tpu.memory_space<semaphore_mem>>)
    %c0_i32_32 = arith.constant 0 : i32
    %c0_i32_33 = arith.constant 0 : i32
    %57 = arith.addi %c0_i32_32, %c0_i32_33 : i32
    %c1_i32_34 = arith.constant 1 : i32
    scf.for %arg6 = %c0_i32_32 to %57 step %c1_i32_34  : i32 {
      %c8_i32_40 = arith.constant 8 : i32
      %c0_i32_41 = arith.constant 0 : i32
      %59 = arith.cmpi eq, %c8_i32_40, %c0_i32_41 : i32
      %c1_i32_42 = arith.constant 1 : i32
      %60 = arith.select %59, %c1_i32_42, %c8_i32_40 : i32
      %61 = arith.remsi %arg6, %60 : i32
      %c0_i32_43 = arith.constant 0 : i32
      %62 = arith.cmpi ne, %61, %c0_i32_43 : i32
      %c0_i32_44 = arith.constant 0 : i32
      %63 = arith.cmpi slt, %61, %c0_i32_44 : i32
      %c0_i32_45 = arith.constant 0 : i32
      %64 = arith.cmpi slt, %60, %c0_i32_45 : i32
      %65 = arith.xori %63, %64 : i1
      %66 = arith.andi %65, %62 : i1
      %67 = arith.addi %61, %60 : i32
      %68 = arith.select %66, %67, %61 : i32
      %c0_i32_46 = arith.constant 0 : i32
      %c0_i32_47 = arith.constant 0 : i32
      %69 = tpu.memref_slice %arg3[%c0_i32_46, %c0_i32_47] : memref<64x128xf32, #tpu.memory_space<vmem>> -> memref<1x128xf32, #tpu.memory_space<vmem>>
      %c0_i32_48 = arith.constant 0 : i32
      %70 = tpu.memref_slice %arg4[%arg6, %c0_i32_48] : memref<8x128xf32, #tpu.memory_space<vmem>> -> memref<1x128xf32, #tpu.memory_space<vmem>>
      %71 = tpu.memref_slice %arg5[%68] : memref<8x!tpu.dma_semaphore, #tpu.memory_space<semaphore_mem>> -> memref<1x!tpu.dma_semaphore, #tpu.memory_space<semaphore_mem>>
      %72 = tpu.memref_squeeze %71 : memref<1x!tpu.dma_semaphore, #tpu.memory_space<semaphore_mem>> -> memref<!tpu.dma_semaphore, #tpu.memory_space<semaphore_mem>>
      tpu.wait_dma2 semaphore(%72 : memref<!tpu.dma_semaphore, #tpu.memory_space<semaphore_mem>>) src(%69 : memref<1x128xf32, #tpu.memory_space<vmem>>) dst(%70 : memref<1x128xf32, #tpu.memory_space<vmem>>)
      %c8_i32_49 = arith.constant 8 : i32
      %73 = arith.addi %arg6, %c8_i32_49 : i32
      %74 = arith.addi %0, %73 : i32
      %75 = arith.index_cast %74 : i32 to index
      %76 = memref.load %arg2[%75] : memref<16xi32, #tpu.memory_space<smem>>
      %c8_i32_50 = arith.constant 8 : i32
      %c0_i32_51 = arith.constant 0 : i32
      %77 = arith.cmpi eq, %c8_i32_50, %c0_i32_51 : i32
      %c1_i32_52 = arith.constant 1 : i32
      %78 = arith.select %77, %c1_i32_52, %c8_i32_50 : i32
      %79 = arith.remsi %73, %78 : i32
      %c0_i32_53 = arith.constant 0 : i32
      %80 = arith.cmpi ne, %79, %c0_i32_53 : i32
      %c0_i32_54 = arith.constant 0 : i32
      %81 = arith.cmpi slt, %79, %c0_i32_54 : i32
      %c0_i32_55 = arith.constant 0 : i32
      %82 = arith.cmpi slt, %78, %c0_i32_55 : i32
      %83 = arith.xori %81, %82 : i1
      %84 = arith.andi %83, %80 : i1
      %85 = arith.addi %79, %78 : i32
      %86 = arith.select %84, %85, %79 : i32
      %c0_i32_56 = arith.constant 0 : i32
      %87 = tpu.memref_slice %arg3[%76, %c0_i32_56] : memref<64x128xf32, #tpu.memory_space<vmem>> -> memref<1x128xf32, #tpu.memory_space<vmem>>
      %c0_i32_57 = arith.constant 0 : i32
      %88 = tpu.memref_slice %arg4[%73, %c0_i32_57] : memref<8x128xf32, #tpu.memory_space<vmem>> -> memref<1x128xf32, #tpu.memory_space<vmem>>
      %89 = tpu.memref_slice %arg5[%86] : memref<8x!tpu.dma_semaphore, #tpu.memory_space<semaphore_mem>> -> memref<1x!tpu.dma_semaphore, #tpu.memory_space<semaphore_mem>>
      %90 = tpu.memref_squeeze %89 : memref<1x!tpu.dma_semaphore, #tpu.memory_space<semaphore_mem>> -> memref<!tpu.dma_semaphore, #tpu.memory_space<semaphore_mem>>
      tpu.enqueue_dma source(%87 : memref<1x128xf32, #tpu.memory_space<vmem>>) target(%88 : memref<1x128xf32, #tpu.memory_space<vmem>>) target_semaphore(%90 : memref<!tpu.dma_semaphore, #tpu.memory_space<semaphore_mem>>)
    }
    %c0_i32_35 = arith.constant 0 : i32
    %c0_i32_36 = arith.constant 0 : i32
    %c8_i32_37 = arith.constant 8 : i32
    %58 = arith.addi %c0_i32_36, %c8_i32_37 : i32
    %c1_i32_38 = arith.constant 1 : i32
    scf.for %arg6 = %c0_i32_36 to %58 step %c1_i32_38  : i32 {
      %c8_i32_40 = arith.constant 8 : i32
      %c0_i32_41 = arith.constant 0 : i32
      %59 = arith.cmpi eq, %c8_i32_40, %c0_i32_41 : i32
      %c1_i32_42 = arith.constant 1 : i32
      %60 = arith.select %59, %c1_i32_42, %c8_i32_40 : i32
      %61 = arith.remsi %arg6, %60 : i32
      %c0_i32_43 = arith.constant 0 : i32
      %62 = arith.cmpi ne, %61, %c0_i32_43 : i32
      %c0_i32_44 = arith.constant 0 : i32
      %63 = arith.cmpi slt, %61, %c0_i32_44 : i32
      %c0_i32_45 = arith.constant 0 : i32
      %64 = arith.cmpi slt, %60, %c0_i32_45 : i32
      %65 = arith.xori %63, %64 : i1
      %66 = arith.andi %65, %62 : i1
      %67 = arith.addi %61, %60 : i32
      %68 = arith.select %66, %67, %61 : i32
      %c0_i32_46 = arith.constant 0 : i32
      %c0_i32_47 = arith.constant 0 : i32
      %69 = tpu.memref_slice %arg3[%c0_i32_46, %c0_i32_47] : memref<64x128xf32, #tpu.memory_space<vmem>> -> memref<1x128xf32, #tpu.memory_space<vmem>>
      %c0_i32_48 = arith.constant 0 : i32
      %70 = tpu.memref_slice %arg4[%arg6, %c0_i32_48] : memref<8x128xf32, #tpu.memory_space<vmem>> -> memref<1x128xf32, #tpu.memory_space<vmem>>
      %71 = tpu.memref_slice %arg5[%68] : memref<8x!tpu.dma_semaphore, #tpu.memory_space<semaphore_mem>> -> memref<1x!tpu.dma_semaphore, #tpu.memory_space<semaphore_mem>>
      %72 = tpu.memref_squeeze %71 : memref<1x!tpu.dma_semaphore, #tpu.memory_space<semaphore_mem>> -> memref<!tpu.dma_semaphore, #tpu.memory_space<semaphore_mem>>
      tpu.wait_dma2 semaphore(%72 : memref<!tpu.dma_semaphore, #tpu.memory_space<semaphore_mem>>) src(%69 : memref<1x128xf32, #tpu.memory_space<vmem>>) dst(%70 : memref<1x128xf32, #tpu.memory_space<vmem>>)
    }
    %c8_i32_39 = arith.constant 8 : i32
    return
  }
  func.func @transform_0(%arg0: i32, %arg1: i32, %arg2: memref<16xi32, #tpu.memory_space<smem>>) -> (i32, i32) {
    %c0_i32 = arith.constant 0 : i32
    %c0_i32_0 = arith.constant 0 : i32
    return %c0_i32, %arg1 : i32, i32
  }
  func.func @transform_1(%arg0: i32, %arg1: i32, %arg2: memref<16xi32, #tpu.memory_space<smem>>) -> (i32, i32) {
    %c0_i32 = arith.constant 0 : i32
    return %arg0, %arg1 : i32, i32
  }
}

</mosaic_0001>

<llo_original>
// kernel: tpu_custom_call.1
$region0: #{tpu_custom_call.1}
  #allocation0 [shape = 'u32[]', space=smem, size = 0x4, offset = 0x4, fixed_abs, tag = 'smem constant byte address 0x4 - core index']
  #allocation1 [shape = 'u32[144,128]{1,0:T(1,128)}', space=vmem, size = 0x12000, scoped, tag = 'internal scratch']
  #allocation2 [shape = 's32[8]{0}', space=sflag, size = 0x20, scoped, tag = 'scratch operand']
  #allocation3 [shape = 's32[1]{0}', space=sflag, size = 0x4, scoped, tag = 'scoped memory for tpu_custom_call.1']
  #allocation4 [shape = 'u8[512]{0}', space=smem, size = 0x200, scoped, tag = 'prefetched SMEM operand 0']
  #allocation9 [shape = 's32[]', space=sflag, size = 0x4, offset = 0, fixed_abs, tag = 'sflag constant byte address 0x0 - dummy sync flag']
  #allocation10 [shape = 's32[]', space=sflag, size = 0x4, offset = 0, fixed_abs, tag = 'sflag constant byte address 0x0 - dummy sync flag']
  #allocation11 [shape = 's32[]', space=sflag, size = 0x4, offset = 0, fixed_abs, tag = 'sflag constant byte address 0x0 - dummy sync flag']
  #allocation12 [shape = 's32[]', space=sflag, size = 0x4, offset = 0, fixed_abs, tag = 'sflag constant byte address 0x0 - dummy sync flag']
  #allocation13 [shape = 's32[]', space=sflag, size = 0x4, offset = 0, fixed_abs, tag = 'sflag constant byte address 0x0 - dummy sync flag']
  #allocation14 [shape = 's32[]', space=sflag, size = 0x4, offset = 0, fixed_abs, tag = 'sflag constant byte address 0x0 - dummy sync flag']
  #allocation15 [shape = 's32[]', space=sflag, size = 0x4, offset = 0, fixed_abs, tag = 'sflag constant byte address 0x0 - dummy sync flag']
  #allocation16 [shape = 's32[]', space=sflag, size = 0x4, offset = 0, fixed_abs, tag = 'sflag constant byte address 0x0 - dummy sync flag']
  %s0 = inlined_call_operand.hbm [shape: s32[16], index: 0, kind: input, shape index: {}]
  %s1 = inlined_call_operand.hbm [shape: f32[64,128], index: 1, kind: input, shape index: {}]
  %s2 = inlined_call_operand.hbm [shape: f32[16,128], index: 2, kind: output, shape index: {}]
  %s3 = sld [smem:[#allocation0]]
  $region288: #{tpu_custom_call.1} parent=0
    _
  %s5 = ssub.s32 1, %s3
  %s6 = scalar_select 0, %s5, %s3
  %8 = dma.hbm_to_smem %s0, 16, [#allocation4], [#allocation3]
  %9 = dma.done [#allocation3], 16
  %10 = sfence
  $region1: #{tpu_custom_call.1} parent=0
    #allocation5 [shape = 'u8[32768]{0}', space=vmem, size = 0x8000, scoped, tag = 'input window, operand 1, single buffered']
    #allocation6 [shape = 's32[2]{0}', space=sflag, size = 0x8, scoped, tag = 'scoped memory for tpu_custom_call.1']
    #allocation7 [shape = 's32[2]{0}', space=sflag, size = 0x8, scoped, tag = 'scoped memory for tpu_custom_call.1']
    #allocation8 [shape = 'u8[8192]{0}', space=vmem, size = 0x2000, scoped, tag = 'output window, operand 0']
    %11 = vsyncpa [#allocation6], 0
    %12 = vsyncpa [#allocation7], 0
    %s13 = scalar_lea.sflag [#allocation7], 1
    %14 = vsyncpa %s13, 0
    loop: start=0, step=1, limit=4
    $region2: #{tpu_custom_call.1} parent=1 // loop_pre_header
      _
    $region3: #{tpu_custom_call.1} parent=1 // loop_header
      %s16 = sphi 0, %s20
      %p17 = scmp.ge.s32.totalorder %s16, 4
      %s23 = sphi 0, %s35
      %s24 = sphi 0, %s31
      %s25 = sphi 0, %s23
      %s26 = sphi 0, %s24
      %s27 = sphi 0, %s25
      %s28 = sphi 0, %s26
      %s38 = sphi 0, %s40
      %s41 = sphi 0, %s38
      %s42 = sphi 0, %s41
      %s58 = sphi 0, %s42
      %s66 = sphi 0, %s68
      %s69 = sphi 0, %s66
      %s70 = sphi 0, %s69
      %s86 = sphi 0, %s70
    $region4: #{tpu_custom_call.1} parent=1 // loop_header_branch
      %19 = sbr.rel (%p17) target = $region8
    $region5: #{tpu_custom_call.1} parent=1 // loop_body
      %s21 = ssub.s32 %s16, 1
      %s22 = ssub.s32 %s16, 2
      %s29 = sadd.s32 1, %s24
      %p30 = scmp.ge.s32.totalorder %s29, 1
      %s31 = scalar_select %p30, 0, %s29
      %s32 = sadd.s32 1, %s23
      %s33 = scalar_select %p30, %s32, %s23
      %p34 = scmp.ge.s32.totalorder %s33, 2
      %s35 = scalar_select %p34, 0, %s33
      %s36 = ssub.s32 %s24, %s31
      %p37 = scmp.eq.s32.totalorder %s36, 0
      %s39 = sadd.s32 %s38, 1
      %s40 = scalar_select %p37, %s38, %s39
      %p43 = pneg %p37
      %p44 = scmp.eq.s32.totalorder %s16, 1
      %p45 = por %p43, %p44
      %p46 = scmp.ne.s32.totalorder %s38, %s41
      %p47 = scmp.eq.s32.totalorder %s16, 0
      %p48 = por %p46, %p47
      %p49 = scmp.ne.s32.totalorder %s38, %s41
      %p50 = scmp.eq.s32.totalorder %s21, 1
      %p51 = por %p49, %p50
      %p52 = scmp.ne.s32.totalorder %s41, %s42
      %p53 = scmp.eq.s32.totalorder %s21, 0
      %p54 = por %p52, %p53
      %p55 = scmp.ne.s32.totalorder %s41, %s42
      %p56 = scmp.eq.s32.totalorder %s22, 1
      %p57 = por %p55, %p56
      %p59 = scmp.ne.s32.totalorder %s42, %s58
      %p60 = scmp.eq.s32.totalorder %s22, 0
      %p61 = por %p59, %p60
      %s62 = ssub.s32 %s23, %s35
      %s63 = ssub.s32 %s24, %s31
      %s64 = sor.u32 %s62, %s63
      %p65 = scmp.eq.s32.totalorder %s64, 0
      %s67 = sadd.s32 %s66, 1
      %s68 = scalar_select %p65, %s66, %s67
      %p71 = pneg %p65
      %p72 = scmp.eq.s32.totalorder %s16, 1
      %p73 = por %p71, %p72
      %p74 = scmp.ne.s32.totalorder %s66, %s69
      %p75 = scmp.eq.s32.totalorder %s16, 0
      %p76 = por %p74, %p75
      %p77 = scmp.ne.s32.totalorder %s66, %s69
      %p78 = scmp.eq.s32.totalorder %s21, 1
      %p79 = por %p77, %p78
      %p80 = scmp.ne.s32.totalorder %s69, %s70
      %p81 = scmp.eq.s32.totalorder %s21, 0
      %p82 = por %p80, %p81
      %p83 = scmp.ne.s32.totalorder %s69, %s70
      %p84 = scmp.eq.s32.totalorder %s22, 1
      %p85 = por %p83, %p84
      %p87 = scmp.ne.s32.totalorder %s70, %s86
      %p88 = scmp.eq.s32.totalorder %s22, 0
      %p89 = por %p87, %p88
      %p90 = scmp.le.s32.totalorder 1, %s16
      %p91 = scmp.lt.s32.totalorder %s16, 3
      %p92 = pnand %p90, %p91
      %p93 = pneg %p92
      // Predicated region
      $region9: #{tpu_custom_call.1} parent=5 // pred_check
        _
      $region10: #{tpu_custom_call.1} parent=5 // pred_check_branch
        %95 = sbr.rel (%p92) target = $region12
      $region11: #{tpu_custom_call.1} parent=5 // pred_region
        %s96 = ssub.s32 %s16, 1
        // Predicated region
        $region13: #{tpu_custom_call.1} parent=11 // pred_check
          %p97 = pneg %p54
        $region14: #{tpu_custom_call.1} parent=11 // pred_check_branch
          %99 = sbr.rel (%p97) target = $region16
        $region15: #{tpu_custom_call.1} parent=11 // pred_region
          %s101 = ssub.s32 1024, 1024
          %102 = vsyncadd [#allocation6], %s101
          %s103 = smul.addr %s26, 128
          %s104 = scalar_lea.hbm %s1, %s103
          %s105 = sshll.u32 [#allocation5], 4
          %s106 = int_to_ptr.vmem [resolvable:$true] %s105
          %111 = dma.hbm_to_vmem [thread:$0]  %s104, 1024, %s106, [#allocation6], 128, 128, 8
        $region16: #{tpu_custom_call.1} parent=11 // pred_fallthru
          _
      $region12: #{tpu_custom_call.1} parent=5 // pred_fallthru
        _
      %p112 = scmp.lt.s32.totalorder %s16, 2
      // Predicated region
      $region17: #{tpu_custom_call.1} parent=5 // pred_check
        %p113 = pneg %p112
      $region18: #{tpu_custom_call.1} parent=5 // pred_check_branch
        %115 = sbr.rel (%p113) target = $region20
      $region19: #{tpu_custom_call.1} parent=5 // pred_region
        _
      $region20: #{tpu_custom_call.1} parent=5 // pred_fallthru
        _
      %p116 = scmp.le.s32.totalorder 1, %s16
      %p117 = scmp.lt.s32.totalorder %s16, 3
      %p118 = pnand %p116, %p117
      %p119 = pneg %p118
      // Predicated region
      $region21: #{tpu_custom_call.1} parent=5 // pred_check
        _
      $region22: #{tpu_custom_call.1} parent=5 // pred_check_branch
        %121 = sbr.rel (%p118) target = $region24
      $region23: #{tpu_custom_call.1} parent=5 // pred_region
        %s122 = ssub.s32 %s16, 1
        // Predicated region
        $region25: #{tpu_custom_call.1} parent=23 // pred_check
          %p123 = pneg %p54
        $region26: #{tpu_custom_call.1} parent=23 // pred_check_branch
          %125 = sbr.rel (%p123) target = $region28
        $region27: #{tpu_custom_call.1} parent=23 // pred_region
          %126 = dma.done [#allocation6], 1024
        $region28: #{tpu_custom_call.1} parent=23 // pred_fallthru
          _
        %p127 = pneg %p54
        %p128 = pneg %p51
        %p129 = pneg %p82
        %p130 = pneg %p79
        %s131 = sand.u32 %s69, 1
        %s132 = scalar_lea.sflag [#allocation7], %s131
        %s133 = sand.u32 %s69, 1
        %s134 = smul.addr %s133, 8
        %s135 = scalar_lea.vmem [#allocation8], %s134
        %s136 = smul.u32 %s25, 8
        %s137 = sld [smem:[#allocation4 + %s136]]
        %s138 = scalar_lea.vmem [#allocation5], %s137
        %p140 = scmp.lt.u32.totalorder 1, 8
        %p141 = pneg %p140
        // Predicated region
        $region29: #{tpu_custom_call.1} parent=23 // pred_check
          _
        $region30: #{tpu_custom_call.1} parent=23 // pred_check_branch
          %143 = sbr.rel (%p140) target = $region32
        $region31: #{tpu_custom_call.1} parent=23 // pred_region
          %s159 = sand.u32 1, 7
          %p160 = scmp.eq.s32.totalorder %s159, 0
          %p161 = pneg %p160
          // Predicated region
          $region44: #{tpu_custom_call.1} parent=31 // pred_check
            _
          $region45: #{tpu_custom_call.1} parent=31 // pred_check_branch
            %163 = sbr.rel (%p160) target = $region47
          $region46: #{tpu_custom_call.1} parent=31 // pred_region
            %s164 = sand.u32 1, 7
            %s165 = ssub.s32 1, %s164
            %s166 = scalar_lea.vmem %s138, %s165 [#allocation5]
            %s167 = ssub.s32 1, %s164
            %s168 = scalar_lea.vmem %s135, %s167 [#allocation8]
            %s169 = sshll.u32 1, %s164
            %s170 = ssub.s32 %s169, 1
            loop: start=0, step=1, limit=1
            $region48: #{tpu_custom_call.1} parent=46 // loop_pre_header
              _
            $region49: #{tpu_custom_call.1} parent=46 // loop_header
              %s172 = sphi 0, %s176
              %p173 = scmp.ge.s32.totalorder %s172, 1
              %s177 = sphi %s166, %s166
              %s178 = sphi %s168, %s168
            $region50: #{tpu_custom_call.1} parent=46 // loop_header_branch
              %175 = sbr.rel (%p173) target = $region54
            $region51: #{tpu_custom_call.1} parent=46 // loop_body
              %v179 = vld [vmem:[%s177] sm:%s170]
              %180 = vst [vmem:[%s178] sm:%s170] %v179
            $region52: #{tpu_custom_call.1} parent=46 // loop_footer
              %s176 = sadd.s32 1, %s172
            $region53: #{tpu_custom_call.1} parent=46 // loop_footer_branch
              %171 = sbr.rel target = $region49
            $region54: #{tpu_custom_call.1} parent=46 // loop_exit
              _
          $region47: #{tpu_custom_call.1} parent=31 // pred_fallthru
            _
        $region32: #{tpu_custom_call.1} parent=23 // pred_fallthru
          _
        // Predicated region
        $region33: #{tpu_custom_call.1} parent=23 // pred_check
          %p144 = pneg %p140
        $region34: #{tpu_custom_call.1} parent=23 // pred_check_branch
          %146 = sbr.rel (%p144) target = $region36
        $region35: #{tpu_custom_call.1} parent=23 // pred_region
          %s147 = sshll.u32 1, 1
          %s148 = ssub.s32 %s147, 1
          loop: start=0, step=1, limit=1
          $region37: #{tpu_custom_call.1} parent=35 // loop_pre_header
            _
          $region38: #{tpu_custom_call.1} parent=35 // loop_header
            %s150 = sphi 0, %s154
            %p151 = scmp.ge.s32.totalorder %s150, 1
            %s155 = sphi %s138, %s138
            %s156 = sphi %s135, %s135
          $region39: #{tpu_custom_call.1} parent=35 // loop_header_branch
            %153 = sbr.rel (%p151) target = $region43
          $region40: #{tpu_custom_call.1} parent=35 // loop_body
            %v157 = vld [vmem:[%s155] sm:%s148]
            %158 = vst [vmem:[%s156] sm:%s148] %v157
          $region41: #{tpu_custom_call.1} parent=35 // loop_footer
            %s154 = sadd.s32 1, %s150
          $region42: #{tpu_custom_call.1} parent=35 // loop_footer_branch
            %149 = sbr.rel target = $region38
          $region43: #{tpu_custom_call.1} parent=35 // loop_exit
            _
        $region36: #{tpu_custom_call.1} parent=23 // pred_fallthru
          _
        // Predicated region
        $region55: #{tpu_custom_call.1} parent=23 // pred_check
          _
        $region56: #{tpu_custom_call.1} parent=23 // pred_check_branch
          %183 = sbr.rel (0) target = $region58
        $region57: #{tpu_custom_call.1} parent=23 // pred_region
          %184 = vsyncadd [#allocation2], 16
        $region58: #{tpu_custom_call.1} parent=23 // pred_fallthru
          _
        %s185 = sadd.s32 %s136, 1
        %s186 = sld [smem:[#allocation4 + %s185]]
        %s187 = scalar_lea.vmem [#allocation5], %s186
        %s188 = scalar_lea.vmem %s135, 1 [#allocation8]
        %s189 = scalar_lea.sflag [#allocation2], 1
        %p191 = scmp.lt.u32.totalorder 1, 8
        %p192 = pneg %p191
        // Predicated region
        $region59: #{tpu_custom_call.1} parent=23 // pred_check
          _
        $region60: #{tpu_custom_call.1} parent=23 // pred_check_branch
          %194 = sbr.rel (%p191) target = $region62
        $region61: #{tpu_custom_call.1} parent=23 // pred_region
          %s210 = sand.u32 1, 7
          %p211 = scmp.eq.s32.totalorder %s210, 0
          %p212 = pneg %p211
          // Predicated region
          $region74: #{tpu_custom_call.1} parent=61 // pred_check
            _
          $region75: #{tpu_custom_call.1} parent=61 // pred_check_branch
            %214 = sbr.rel (%p211) target = $region77
          $region76: #{tpu_custom_call.1} parent=61 // pred_region
            %s215 = sand.u32 1, 7
            %s216 = ssub.s32 1, %s215
            %s217 = scalar_lea.vmem %s187, %s216 [#allocation5]
            %s218 = ssub.s32 1, %s215
            %s219 = scalar_lea.vmem %s188, %s218 [#allocation8]
            %s220 = sshll.u32 1, %s215
            %s221 = ssub.s32 %s220, 1
            loop: start=0, step=1, limit=1
            $region78: #{tpu_custom_call.1} parent=76 // loop_pre_header
              _
            $region79: #{tpu_custom_call.1} parent=76 // loop_header
              %s223 = sphi 0, %s227
              %p224 = scmp.ge.s32.totalorder %s223, 1
              %s228 = sphi %s217, %s217
              %s229 = sphi %s219, %s219
            $region80: #{tpu_custom_call.1} parent=76 // loop_header_branch
              %226 = sbr.rel (%p224) target = $region84
            $region81: #{tpu_custom_call.1} parent=76 // loop_body
              %v230 = vld [vmem:[%s228] sm:%s221]
              %231 = vst [vmem:[%s229] sm:%s221] %v230
            $region82: #{tpu_custom_call.1} parent=76 // loop_footer
              %s227 = sadd.s32 1, %s223
            $region83: #{tpu_custom_call.1} parent=76 // loop_footer_branch
              %222 = sbr.rel target = $region79
            $region84: #{tpu_custom_call.1} parent=76 // loop_exit
              _
          $region77: #{tpu_custom_call.1} parent=61 // pred_fallthru
            _
        $region62: #{tpu_custom_call.1} parent=23 // pred_fallthru
          _
        // Predicated region
        $region63: #{tpu_custom_call.1} parent=23 // pred_check
          %p195 = pneg %p191
        $region64: #{tpu_custom_call.1} parent=23 // pred_check_branch
          %197 = sbr.rel (%p195) target = $region66
        $region65: #{tpu_custom_call.1} parent=23 // pred_region
          %s198 = sshll.u32 1, 1
          %s199 = ssub.s32 %s198, 1
          loop: start=0, step=1, limit=1
          $region67: #{tpu_custom_call.1} parent=65 // loop_pre_header
            _
          $region68: #{tpu_custom_call.1} parent=65 // loop_header
            %s201 = sphi 0, %s205
            %p202 = scmp.ge.s32.totalorder %s201, 1
            %s206 = sphi %s187, %s187
            %s207 = sphi %s188, %s188
          $region69: #{tpu_custom_call.1} parent=65 // loop_header_branch
            %204 = sbr.rel (%p202) target = $region73
          $region70: #{tpu_custom_call.1} parent=65 // loop_body
            %v208 = vld [vmem:[%s206] sm:%s199]
            %209 = vst [vmem:[%s207] sm:%s199] %v208
          $region71: #{tpu_custom_call.1} parent=65 // loop_footer
            %s205 = sadd.s32 1, %s201
          $region72: #{tpu_custom_call.1} parent=65 // loop_footer_branch
            %200 = sbr.rel target = $region68
          $region73: #{tpu_custom_call.1} parent=65 // loop_exit
            _
        $region66: #{tpu_custom_call.1} parent=23 // pred_fallthru
          _
        // Predicated region
        $region85: #{tpu_custom_call.1} parent=23 // pred_check
          _
        $region86: #{tpu_custom_call.1} parent=23 // pred_check_branch
          %234 = sbr.rel (0) target = $region88
        $region87: #{tpu_custom_call.1} parent=23 // pred_region
          %235 = vsyncadd %s189, 16
        $region88: #{tpu_custom_call.1} parent=23 // pred_fallthru
          _
        %s236 = sadd.s32 %s136, 2
        %s237 = sld [smem:[#allocation4 + %s236]]
        %s238 = scalar_lea.vmem [#allocation5], %s237
        %s239 = scalar_lea.vmem %s135, 2 [#allocation8]
        %s240 = scalar_lea.sflag [#allocation2], 2
        %p242 = scmp.lt.u32.totalorder 1, 8
        %p243 = pneg %p242
        // Predicated region
        $region89: #{tpu_custom_call.1} parent=23 // pred_check
          _
        $region90: #{tpu_custom_call.1} parent=23 // pred_check_branch
          %245 = sbr.rel (%p242) target = $region92
        $region91: #{tpu_custom_call.1} parent=23 // pred_region
          %s261 = sand.u32 1, 7
          %p262 = scmp.eq.s32.totalorder %s261, 0
          %p263 = pneg %p262
          // Predicated region
          $region104: #{tpu_custom_call.1} parent=91 // pred_check
            _
          $region105: #{tpu_custom_call.1} parent=91 // pred_check_branch
            %265 = sbr.rel (%p262) target = $region107
          $region106: #{tpu_custom_call.1} parent=91 // pred_region
            %s266 = sand.u32 1, 7
            %s267 = ssub.s32 1, %s266
            %s268 = scalar_lea.vmem %s238, %s267 [#allocation5]
            %s269 = ssub.s32 1, %s266
            %s270 = scalar_lea.vmem %s239, %s269 [#allocation8]
            %s271 = sshll.u32 1, %s266
            %s272 = ssub.s32 %s271, 1
            loop: start=0, step=1, limit=1
            $region108: #{tpu_custom_call.1} parent=106 // loop_pre_header
              _
            $region109: #{tpu_custom_call.1} parent=106 // loop_header
              %s274 = sphi 0, %s278
              %p275 = scmp.ge.s32.totalorder %s274, 1
              %s279 = sphi %s268, %s268
              %s280 = sphi %s270, %s270
            $region110: #{tpu_custom_call.1} parent=106 // loop_header_branch
              %277 = sbr.rel (%p275) target = $region114
            $region111: #{tpu_custom_call.1} parent=106 // loop_body
              %v281 = vld [vmem:[%s279] sm:%s272]
              %282 = vst [vmem:[%s280] sm:%s272] %v281
            $region112: #{tpu_custom_call.1} parent=106 // loop_footer
              %s278 = sadd.s32 1, %s274
            $region113: #{tpu_custom_call.1} parent=106 // loop_footer_branch
              %273 = sbr.rel target = $region109
            $region114: #{tpu_custom_call.1} parent=106 // loop_exit
              _
          $region107: #{tpu_custom_call.1} parent=91 // pred_fallthru
            _
        $region92: #{tpu_custom_call.1} parent=23 // pred_fallthru
          _
        // Predicated region
        $region93: #{tpu_custom_call.1} parent=23 // pred_check
          %p246 = pneg %p242
        $region94: #{tpu_custom_call.1} parent=23 // pred_check_branch
          %248 = sbr.rel (%p246) target = $region96
        $region95: #{tpu_custom_call.1} parent=23 // pred_region
          %s249 = sshll.u32 1, 1
          %s250 = ssub.s32 %s249, 1
          loop: start=0, step=1, limit=1
          $region97: #{tpu_custom_call.1} parent=95 // loop_pre_header
            _
          $region98: #{tpu_custom_call.1} parent=95 // loop_header
            %s252 = sphi 0, %s256
            %p253 = scmp.ge.s32.totalorder %s252, 1
            %s257 = sphi %s238, %s238
            %s258 = sphi %s239, %s239
          $region99: #{tpu_custom_call.1} parent=95 // loop_header_branch
            %255 = sbr.rel (%p253) target = $region103
          $region100: #{tpu_custom_call.1} parent=95 // loop_body
            %v259 = vld [vmem:[%s257] sm:%s250]
            %260 = vst [vmem:[%s258] sm:%s250] %v259
          $region101: #{tpu_custom_call.1} parent=95 // loop_footer
            %s256 = sadd.s32 1, %s252
          $region102: #{tpu_custom_call.1} parent=95 // loop_footer_branch
            %251 = sbr.rel target = $region98
          $region103: #{tpu_custom_call.1} parent=95 // loop_exit
            _
        $region96: #{tpu_custom_call.1} parent=23 // pred_fallthru
          _
        // Predicated region
        $region115: #{tpu_custom_call.1} parent=23 // pred_check
          _
        $region116: #{tpu_custom_call.1} parent=23 // pred_check_branch
          %285 = sbr.rel (0) target = $region118
        $region117: #{tpu_custom_call.1} parent=23 // pred_region
          %286 = vsyncadd %s240, 16
        $region118: #{tpu_custom_call.1} parent=23 // pred_fallthru
          _
        %s287 = sadd.s32 %s136, 3
        %s288 = sld [smem:[#allocation4 + %s287]]
        %s289 = scalar_lea.vmem [#allocation5], %s288
        %s290 = scalar_lea.vmem %s135, 3 [#allocation8]
        %s291 = scalar_lea.sflag [#allocation2], 3
        %p293 = scmp.lt.u32.totalorder 1, 8
        %p294 = pneg %p293
        // Predicated region
        $region119: #{tpu_custom_call.1} parent=23 // pred_check
          _
        $region120: #{tpu_custom_call.1} parent=23 // pred_check_branch
          %296 = sbr.rel (%p293) target = $region122
        $region121: #{tpu_custom_call.1} parent=23 // pred_region
          %s312 = sand.u32 1, 7
          %p313 = scmp.eq.s32.totalorder %s312, 0
          %p314 = pneg %p313
          // Predicated region
          $region134: #{tpu_custom_call.1} parent=121 // pred_check
            _
          $region135: #{tpu_custom_call.1} parent=121 // pred_check_branch
            %316 = sbr.rel (%p313) target = $region137
          $region136: #{tpu_custom_call.1} parent=121 // pred_region
            %s317 = sand.u32 1, 7
            %s318 = ssub.s32 1, %s317
            %s319 = scalar_lea.vmem %s289, %s318 [#allocation5]
            %s320 = ssub.s32 1, %s317
            %s321 = scalar_lea.vmem %s290, %s320 [#allocation8]
            %s322 = sshll.u32 1, %s317
            %s323 = ssub.s32 %s322, 1
            loop: start=0, step=1, limit=1
            $region138: #{tpu_custom_call.1} parent=136 // loop_pre_header
              _
            $region139: #{tpu_custom_call.1} parent=136 // loop_header
              %s325 = sphi 0, %s329
              %p326 = scmp.ge.s32.totalorder %s325, 1
              %s330 = sphi %s319, %s319
              %s331 = sphi %s321, %s321
            $region140: #{tpu_custom_call.1} parent=136 // loop_header_branch
              %328 = sbr.rel (%p326) target = $region144
            $region141: #{tpu_custom_call.1} parent=136 // loop_body
              %v332 = vld [vmem:[%s330] sm:%s323]
              %333 = vst [vmem:[%s331] sm:%s323] %v332
            $region142: #{tpu_custom_call.1} parent=136 // loop_footer
              %s329 = sadd.s32 1, %s325
            $region143: #{tpu_custom_call.1} parent=136 // loop_footer_branch
              %324 = sbr.rel target = $region139
            $region144: #{tpu_custom_call.1} parent=136 // loop_exit
              _
          $region137: #{tpu_custom_call.1} parent=121 // pred_fallthru
            _
        $region122: #{tpu_custom_call.1} parent=23 // pred_fallthru
          _
        // Predicated region
        $region123: #{tpu_custom_call.1} parent=23 // pred_check
          %p297 = pneg %p293
        $region124: #{tpu_custom_call.1} parent=23 // pred_check_branch
          %299 = sbr.rel (%p297) target = $region126
        $region125: #{tpu_custom_call.1} parent=23 // pred_region
          %s300 = sshll.u32 1, 1
          %s301 = ssub.s32 %s300, 1
          loop: start=0, step=1, limit=1
          $region127: #{tpu_custom_call.1} parent=125 // loop_pre_header
            _
          $region128: #{tpu_custom_call.1} parent=125 // loop_header
            %s303 = sphi 0, %s307
            %p304 = scmp.ge.s32.totalorder %s303, 1
            %s308 = sphi %s289, %s289
            %s309 = sphi %s290, %s290
          $region129: #{tpu_custom_call.1} parent=125 // loop_header_branch
            %306 = sbr.rel (%p304) target = $region133
          $region130: #{tpu_custom_call.1} parent=125 // loop_body
            %v310 = vld [vmem:[%s308] sm:%s301]
            %311 = vst [vmem:[%s309] sm:%s301] %v310
          $region131: #{tpu_custom_call.1} parent=125 // loop_footer
            %s307 = sadd.s32 1, %s303
          $region132: #{tpu_custom_call.1} parent=125 // loop_footer_branch
            %302 = sbr.rel target = $region128
          $region133: #{tpu_custom_call.1} parent=125 // loop_exit
            _
        $region126: #{tpu_custom_call.1} parent=23 // pred_fallthru
          _
        // Predicated region
        $region145: #{tpu_custom_call.1} parent=23 // pred_check
          _
        $region146: #{tpu_custom_call.1} parent=23 // pred_check_branch
          %336 = sbr.rel (0) target = $region148
        $region147: #{tpu_custom_call.1} parent=23 // pred_region
          %337 = vsyncadd %s291, 16
        $region148: #{tpu_custom_call.1} parent=23 // pred_fallthru
          _
        %s338 = sadd.s32 %s136, 4
        %s339 = sld [smem:[#allocation4 + %s338]]
        %s340 = scalar_lea.vmem [#allocation5], %s339
        %s341 = scalar_lea.vmem %s135, 4 [#allocation8]
        %s342 = scalar_lea.sflag [#allocation2], 4
        %p344 = scmp.lt.u32.totalorder 1, 8
        %p345 = pneg %p344
        // Predicated region
        $region149: #{tpu_custom_call.1} parent=23 // pred_check
          _
        $region150: #{tpu_custom_call.1} parent=23 // pred_check_branch
          %347 = sbr.rel (%p344) target = $region152
        $region151: #{tpu_custom_call.1} parent=23 // pred_region
          %s363 = sand.u32 1, 7
          %p364 = scmp.eq.s32.totalorder %s363, 0
          %p365 = pneg %p364
          // Predicated region
          $region164: #{tpu_custom_call.1} parent=151 // pred_check
            _
          $region165: #{tpu_custom_call.1} parent=151 // pred_check_branch
            %367 = sbr.rel (%p364) target = $region167
          $region166: #{tpu_custom_call.1} parent=151 // pred_region
            %s368 = sand.u32 1, 7
            %s369 = ssub.s32 1, %s368
            %s370 = scalar_lea.vmem %s340, %s369 [#allocation5]
            %s371 = ssub.s32 1, %s368
            %s372 = scalar_lea.vmem %s341, %s371 [#allocation8]
            %s373 = sshll.u32 1, %s368
            %s374 = ssub.s32 %s373, 1
            loop: start=0, step=1, limit=1
            $region168: #{tpu_custom_call.1} parent=166 // loop_pre_header
              _
            $region169: #{tpu_custom_call.1} parent=166 // loop_header
              %s376 = sphi 0, %s380
              %p377 = scmp.ge.s32.totalorder %s376, 1
              %s381 = sphi %s370, %s370
              %s382 = sphi %s372, %s372
            $region170: #{tpu_custom_call.1} parent=166 // loop_header_branch
              %379 = sbr.rel (%p377) target = $region174
            $region171: #{tpu_custom_call.1} parent=166 // loop_body
              %v383 = vld [vmem:[%s381] sm:%s374]
              %384 = vst [vmem:[%s382] sm:%s374] %v383
            $region172: #{tpu_custom_call.1} parent=166 // loop_footer
              %s380 = sadd.s32 1, %s376
            $region173: #{tpu_custom_call.1} parent=166 // loop_footer_branch
              %375 = sbr.rel target = $region169
            $region174: #{tpu_custom_call.1} parent=166 // loop_exit
              _
          $region167: #{tpu_custom_call.1} parent=151 // pred_fallthru
            _
        $region152: #{tpu_custom_call.1} parent=23 // pred_fallthru
          _
        // Predicated region
        $region153: #{tpu_custom_call.1} parent=23 // pred_check
          %p348 = pneg %p344
        $region154: #{tpu_custom_call.1} parent=23 // pred_check_branch
          %350 = sbr.rel (%p348) target = $region156
        $region155: #{tpu_custom_call.1} parent=23 // pred_region
          %s351 = sshll.u32 1, 1
          %s352 = ssub.s32 %s351, 1
          loop: start=0, step=1, limit=1
          $region157: #{tpu_custom_call.1} parent=155 // loop_pre_header
            _
          $region158: #{tpu_custom_call.1} parent=155 // loop_header
            %s354 = sphi 0, %s358
            %p355 = scmp.ge.s32.totalorder %s354, 1
            %s359 = sphi %s340, %s340
            %s360 = sphi %s341, %s341
          $region159: #{tpu_custom_call.1} parent=155 // loop_header_branch
            %357 = sbr.rel (%p355) target = $region163
          $region160: #{tpu_custom_call.1} parent=155 // loop_body
            %v361 = vld [vmem:[%s359] sm:%s352]
            %362 = vst [vmem:[%s360] sm:%s352] %v361
          $region161: #{tpu_custom_call.1} parent=155 // loop_footer
            %s358 = sadd.s32 1, %s354
          $region162: #{tpu_custom_call.1} parent=155 // loop_footer_branch
            %353 = sbr.rel target = $region158
          $region163: #{tpu_custom_call.1} parent=155 // loop_exit
            _
        $region156: #{tpu_custom_call.1} parent=23 // pred_fallthru
          _
        // Predicated region
        $region175: #{tpu_custom_call.1} parent=23 // pred_check
          _
        $region176: #{tpu_custom_call.1} parent=23 // pred_check_branch
          %387 = sbr.rel (0) target = $region178
        $region177: #{tpu_custom_call.1} parent=23 // pred_region
          %388 = vsyncadd %s342, 16
        $region178: #{tpu_custom_call.1} parent=23 // pred_fallthru
          _
        %s389 = sadd.s32 %s136, 5
        %s390 = sld [smem:[#allocation4 + %s389]]
        %s391 = scalar_lea.vmem [#allocation5], %s390
        %s392 = scalar_lea.vmem %s135, 5 [#allocation8]
        %s393 = scalar_lea.sflag [#allocation2], 5
        %p395 = scmp.lt.u32.totalorder 1, 8
        %p396 = pneg %p395
        // Predicated region
        $region179: #{tpu_custom_call.1} parent=23 // pred_check
          _
        $region180: #{tpu_custom_call.1} parent=23 // pred_check_branch
          %398 = sbr.rel (%p395) target = $region182
        $region181: #{tpu_custom_call.1} parent=23 // pred_region
          %s414 = sand.u32 1, 7
          %p415 = scmp.eq.s32.totalorder %s414, 0
          %p416 = pneg %p415
          // Predicated region
          $region194: #{tpu_custom_call.1} parent=181 // pred_check
            _
          $region195: #{tpu_custom_call.1} parent=181 // pred_check_branch
            %418 = sbr.rel (%p415) target = $region197
          $region196: #{tpu_custom_call.1} parent=181 // pred_region
            %s419 = sand.u32 1, 7
            %s420 = ssub.s32 1, %s419
            %s421 = scalar_lea.vmem %s391, %s420 [#allocation5]
            %s422 = ssub.s32 1, %s419
            %s423 = scalar_lea.vmem %s392, %s422 [#allocation8]
            %s424 = sshll.u32 1, %s419
            %s425 = ssub.s32 %s424, 1
            loop: start=0, step=1, limit=1
            $region198: #{tpu_custom_call.1} parent=196 // loop_pre_header
              _
            $region199: #{tpu_custom_call.1} parent=196 // loop_header
              %s427 = sphi 0, %s431
              %p428 = scmp.ge.s32.totalorder %s427, 1
              %s432 = sphi %s421, %s421
              %s433 = sphi %s423, %s423
            $region200: #{tpu_custom_call.1} parent=196 // loop_header_branch
              %430 = sbr.rel (%p428) target = $region204
            $region201: #{tpu_custom_call.1} parent=196 // loop_body
              %v434 = vld [vmem:[%s432] sm:%s425]
              %435 = vst [vmem:[%s433] sm:%s425] %v434
            $region202: #{tpu_custom_call.1} parent=196 // loop_footer
              %s431 = sadd.s32 1, %s427
            $region203: #{tpu_custom_call.1} parent=196 // loop_footer_branch
              %426 = sbr.rel target = $region199
            $region204: #{tpu_custom_call.1} parent=196 // loop_exit
              _
          $region197: #{tpu_custom_call.1} parent=181 // pred_fallthru
            _
        $region182: #{tpu_custom_call.1} parent=23 // pred_fallthru
          _
        // Predicated region
        $region183: #{tpu_custom_call.1} parent=23 // pred_check
          %p399 = pneg %p395
        $region184: #{tpu_custom_call.1} parent=23 // pred_check_branch
          %401 = sbr.rel (%p399) target = $region186
        $region185: #{tpu_custom_call.1} parent=23 // pred_region
          %s402 = sshll.u32 1, 1
          %s403 = ssub.s32 %s402, 1
          loop: start=0, step=1, limit=1
          $region187: #{tpu_custom_call.1} parent=185 // loop_pre_header
            _
          $region188: #{tpu_custom_call.1} parent=185 // loop_header
            %s405 = sphi 0, %s409
            %p406 = scmp.ge.s32.totalorder %s405, 1
            %s410 = sphi %s391, %s391
            %s411 = sphi %s392, %s392
          $region189: #{tpu_custom_call.1} parent=185 // loop_header_branch
            %408 = sbr.rel (%p406) target = $region193
          $region190: #{tpu_custom_call.1} parent=185 // loop_body
            %v412 = vld [vmem:[%s410] sm:%s403]
            %413 = vst [vmem:[%s411] sm:%s403] %v412
          $region191: #{tpu_custom_call.1} parent=185 // loop_footer
            %s409 = sadd.s32 1, %s405
          $region192: #{tpu_custom_call.1} parent=185 // loop_footer_branch
            %404 = sbr.rel target = $region188
          $region193: #{tpu_custom_call.1} parent=185 // loop_exit
            _
        $region186: #{tpu_custom_call.1} parent=23 // pred_fallthru
          _
        // Predicated region
        $region205: #{tpu_custom_call.1} parent=23 // pred_check
          _
        $region206: #{tpu_custom_call.1} parent=23 // pred_check_branch
          %438 = sbr.rel (0) target = $region208
        $region207: #{tpu_custom_call.1} parent=23 // pred_region
          %439 = vsyncadd %s393, 16
        $region208: #{tpu_custom_call.1} parent=23 // pred_fallthru
          _
        %s440 = sadd.s32 %s136, 6
        %s441 = sld [smem:[#allocation4 + %s440]]
        %s442 = scalar_lea.vmem [#allocation5], %s441
        %s443 = scalar_lea.vmem %s135, 6 [#allocation8]
        %s444 = scalar_lea.sflag [#allocation2], 6
        %p446 = scmp.lt.u32.totalorder 1, 8
        %p447 = pneg %p446
        // Predicated region
        $region209: #{tpu_custom_call.1} parent=23 // pred_check
          _
        $region210: #{tpu_custom_call.1} parent=23 // pred_check_branch
          %449 = sbr.rel (%p446) target = $region212
        $region211: #{tpu_custom_call.1} parent=23 // pred_region
          %s465 = sand.u32 1, 7
          %p466 = scmp.eq.s32.totalorder %s465, 0
          %p467 = pneg %p466
          // Predicated region
          $region224: #{tpu_custom_call.1} parent=211 // pred_check
            _
          $region225: #{tpu_custom_call.1} parent=211 // pred_check_branch
            %469 = sbr.rel (%p466) target = $region227
          $region226: #{tpu_custom_call.1} parent=211 // pred_region
            %s470 = sand.u32 1, 7
            %s471 = ssub.s32 1, %s470
            %s472 = scalar_lea.vmem %s442, %s471 [#allocation5]
            %s473 = ssub.s32 1, %s470
            %s474 = scalar_lea.vmem %s443, %s473 [#allocation8]
            %s475 = sshll.u32 1, %s470
            %s476 = ssub.s32 %s475, 1
            loop: start=0, step=1, limit=1
            $region228: #{tpu_custom_call.1} parent=226 // loop_pre_header
              _
            $region229: #{tpu_custom_call.1} parent=226 // loop_header
              %s478 = sphi 0, %s482
              %p479 = scmp.ge.s32.totalorder %s478, 1
              %s483 = sphi %s472, %s472
              %s484 = sphi %s474, %s474
            $region230: #{tpu_custom_call.1} parent=226 // loop_header_branch
              %481 = sbr.rel (%p479) target = $region234
            $region231: #{tpu_custom_call.1} parent=226 // loop_body
              %v485 = vld [vmem:[%s483] sm:%s476]
              %486 = vst [vmem:[%s484] sm:%s476] %v485
            $region232: #{tpu_custom_call.1} parent=226 // loop_footer
              %s482 = sadd.s32 1, %s478
            $region233: #{tpu_custom_call.1} parent=226 // loop_footer_branch
              %477 = sbr.rel target = $region229
            $region234: #{tpu_custom_call.1} parent=226 // loop_exit
              _
          $region227: #{tpu_custom_call.1} parent=211 // pred_fallthru
            _
        $region212: #{tpu_custom_call.1} parent=23 // pred_fallthru
          _
        // Predicated region
        $region213: #{tpu_custom_call.1} parent=23 // pred_check
          %p450 = pneg %p446
        $region214: #{tpu_custom_call.1} parent=23 // pred_check_branch
          %452 = sbr.rel (%p450) target = $region216
        $region215: #{tpu_custom_call.1} parent=23 // pred_region
          %s453 = sshll.u32 1, 1
          %s454 = ssub.s32 %s453, 1
          loop: start=0, step=1, limit=1
          $region217: #{tpu_custom_call.1} parent=215 // loop_pre_header
            _
          $region218: #{tpu_custom_call.1} parent=215 // loop_header
            %s456 = sphi 0, %s460
            %p457 = scmp.ge.s32.totalorder %s456, 1
            %s461 = sphi %s442, %s442
            %s462 = sphi %s443, %s443
          $region219: #{tpu_custom_call.1} parent=215 // loop_header_branch
            %459 = sbr.rel (%p457) target = $region223
          $region220: #{tpu_custom_call.1} parent=215 // loop_body
            %v463 = vld [vmem:[%s461] sm:%s454]
            %464 = vst [vmem:[%s462] sm:%s454] %v463
          $region221: #{tpu_custom_call.1} parent=215 // loop_footer
            %s460 = sadd.s32 1, %s456
          $region222: #{tpu_custom_call.1} parent=215 // loop_footer_branch
            %455 = sbr.rel target = $region218
          $region223: #{tpu_custom_call.1} parent=215 // loop_exit
            _
        $region216: #{tpu_custom_call.1} parent=23 // pred_fallthru
          _
        // Predicated region
        $region235: #{tpu_custom_call.1} parent=23 // pred_check
          _
        $region236: #{tpu_custom_call.1} parent=23 // pred_check_branch
          %489 = sbr.rel (0) target = $region238
        $region237: #{tpu_custom_call.1} parent=23 // pred_region
          %490 = vsyncadd %s444, 16
        $region238: #{tpu_custom_call.1} parent=23 // pred_fallthru
          _
        %s491 = sadd.s32 %s136, 7
        %s492 = sld [smem:[#allocation4 + %s491]]
        %s493 = scalar_lea.vmem [#allocation5], %s492
        %s494 = scalar_lea.vmem %s135, 7 [#allocation8]
        %s495 = scalar_lea.sflag [#allocation2], 7
        %p497 = scmp.lt.u32.totalorder 1, 8
        %p498 = pneg %p497
        // Predicated region
        $region239: #{tpu_custom_call.1} parent=23 // pred_check
          _
        $region240: #{tpu_custom_call.1} parent=23 // pred_check_branch
          %500 = sbr.rel (%p497) target = $region242
        $region241: #{tpu_custom_call.1} parent=23 // pred_region
          %s516 = sand.u32 1, 7
          %p517 = scmp.eq.s32.totalorder %s516, 0
          %p518 = pneg %p517
          // Predicated region
          $region254: #{tpu_custom_call.1} parent=241 // pred_check
            _
          $region255: #{tpu_custom_call.1} parent=241 // pred_check_branch
            %520 = sbr.rel (%p517) target = $region257
          $region256: #{tpu_custom_call.1} parent=241 // pred_region
            %s521 = sand.u32 1, 7
            %s522 = ssub.s32 1, %s521
            %s523 = scalar_lea.vmem %s493, %s522 [#allocation5]
            %s524 = ssub.s32 1, %s521
            %s525 = scalar_lea.vmem %s494, %s524 [#allocation8]
            %s526 = sshll.u32 1, %s521
            %s527 = ssub.s32 %s526, 1
            loop: start=0, step=1, limit=1
            $region258: #{tpu_custom_call.1} parent=256 // loop_pre_header
              _
            $region259: #{tpu_custom_call.1} parent=256 // loop_header
              %s529 = sphi 0, %s533
              %p530 = scmp.ge.s32.totalorder %s529, 1
              %s534 = sphi %s523, %s523
              %s535 = sphi %s525, %s525
            $region260: #{tpu_custom_call.1} parent=256 // loop_header_branch
              %532 = sbr.rel (%p530) target = $region264
            $region261: #{tpu_custom_call.1} parent=256 // loop_body
              %v536 = vld [vmem:[%s534] sm:%s527]
              %537 = vst [vmem:[%s535] sm:%s527] %v536
            $region262: #{tpu_custom_call.1} parent=256 // loop_footer
              %s533 = sadd.s32 1, %s529
            $region263: #{tpu_custom_call.1} parent=256 // loop_footer_branch
              %528 = sbr.rel target = $region259
            $region264: #{tpu_custom_call.1} parent=256 // loop_exit
              _
          $region257: #{tpu_custom_call.1} parent=241 // pred_fallthru
            _
        $region242: #{tpu_custom_call.1} parent=23 // pred_fallthru
          _
        // Predicated region
        $region243: #{tpu_custom_call.1} parent=23 // pred_check
          %p501 = pneg %p497
        $region244: #{tpu_custom_call.1} parent=23 // pred_check_branch
          %503 = sbr.rel (%p501) target = $region246
        $region245: #{tpu_custom_call.1} parent=23 // pred_region
          %s504 = sshll.u32 1, 1
          %s505 = ssub.s32 %s504, 1
          loop: start=0, step=1, limit=1
          $region247: #{tpu_custom_call.1} parent=245 // loop_pre_header
            _
          $region248: #{tpu_custom_call.1} parent=245 // loop_header
            %s507 = sphi 0, %s511
            %p508 = scmp.ge.s32.totalorder %s507, 1
            %s512 = sphi %s493, %s493
            %s513 = sphi %s494, %s494
          $region249: #{tpu_custom_call.1} parent=245 // loop_header_branch
            %510 = sbr.rel (%p508) target = $region253
          $region250: #{tpu_custom_call.1} parent=245 // loop_body
            %v514 = vld [vmem:[%s512] sm:%s505]
            %515 = vst [vmem:[%s513] sm:%s505] %v514
          $region251: #{tpu_custom_call.1} parent=245 // loop_footer
            %s511 = sadd.s32 1, %s507
          $region252: #{tpu_custom_call.1} parent=245 // loop_footer_branch
            %506 = sbr.rel target = $region248
          $region253: #{tpu_custom_call.1} parent=245 // loop_exit
            _
        $region246: #{tpu_custom_call.1} parent=23 // pred_fallthru
          _
        // Predicated region
        $region265: #{tpu_custom_call.1} parent=23 // pred_check
          _
        $region266: #{tpu_custom_call.1} parent=23 // pred_check_branch
          %540 = sbr.rel (0) target = $region268
        $region267: #{tpu_custom_call.1} parent=23 // pred_region
          %541 = vsyncadd %s495, 16
        $region268: #{tpu_custom_call.1} parent=23 // pred_fallthru
          _
        loop: start=0, step=1, limit=8
        $region269: #{tpu_custom_call.1} parent=23 // loop_pre_header
          _
        $region270: #{tpu_custom_call.1} parent=23 // loop_header
          %s543 = sphi 0, %s547
          %p544 = scmp.ge.s32.totalorder %s543, 8
        $region271: #{tpu_custom_call.1} parent=23 // loop_header_branch
          %546 = sbr.rel (%p544) target = $region275
        $region272: #{tpu_custom_call.1} parent=23 // loop_body
          %p548 = scmp.lt.s32.totalorder %s543, 0
          %s549 = ssub.s32 0, %s543
          %s550 = scalar_select %p548, %s549, %s543
          %s551 = sand.u32 %s550, 7
          %s552 = ssub.s32 0, %s551
          %s553 = scalar_select %p548, %s552, %s551
          %p554 = scmp.ne.s32.totalorder %s553, 0
          %p555 = scmp.lt.s32.totalorder %s553, 0
          %p556 = pnand %p555, %p554
          %p557 = pneg %p556
          %s558 = sadd.s32 %s553, 8
          %s559 = scalar_select %p557, %s558, %s553
          %s560 = scalar_lea.sflag [#allocation2], %s559
          %s561 = smul.u32 1, 1
          %s562 = sshll.u32 %s561, 4
          %563 = dma.done %s560, %s562
        $region273: #{tpu_custom_call.1} parent=23 // loop_footer
          %s547 = sadd.s32 1, %s543
        $region274: #{tpu_custom_call.1} parent=23 // loop_footer_branch
          %542 = sbr.rel target = $region270
        $region275: #{tpu_custom_call.1} parent=23 // loop_exit
          _
        %s564 = sand.u32 %s69, 1
        %s565 = scalar_lea.sflag [#allocation7], %s564
        %s566 = sand.u32 %s69, 1
        %s567 = smul.addr %s566, 8
        %s568 = scalar_lea.vmem [#allocation8], %s567
        // Predicated region
        $region276: #{tpu_custom_call.1} parent=23 // pred_check
          %p569 = pneg %p79
        $region277: #{tpu_custom_call.1} parent=23 // pred_check_branch
          %571 = sbr.rel (%p569) target = $region279
        $region278: #{tpu_custom_call.1} parent=23 // pred_region
          %s573 = ssub.s32 128, 128
          %574 = vsyncadd %s565, %s573
          %s575 = sadd.s32 %s26, %s25
          %s576 = smul.addr %s575, 128
          %s577 = scalar_lea.hbm %s2, %s576
          %s579 = sshll.u32 %s568, 4
          %s580 = int_to_ptr.vmem [resolvable:$true] %s579
          %582 = dma.vmem_to_hbm [thread:$0]  %s580, 128, %s577, %s565
        $region279: #{tpu_custom_call.1} parent=23 // pred_fallthru
          _
      $region24: #{tpu_custom_call.1} parent=5 // pred_fallthru
        _
      %p583 = scmp.le.s32.totalorder 2, %s16
      // Predicated region
      $region280: #{tpu_custom_call.1} parent=5 // pred_check
        %p584 = pneg %p583
      $region281: #{tpu_custom_call.1} parent=5 // pred_check_branch
        %586 = sbr.rel (%p584) target = $region283
      $region282: #{tpu_custom_call.1} parent=5 // pred_region
        %s587 = ssub.s32 %s16, 2
        // Predicated region
        $region284: #{tpu_custom_call.1} parent=282 // pred_check
          %p588 = pneg %p85
        $region285: #{tpu_custom_call.1} parent=282 // pred_check_branch
          %590 = sbr.rel (%p588) target = $region287
        $region286: #{tpu_custom_call.1} parent=282 // pred_region
          %s591 = sand.u32 %s70, 1
          %s592 = scalar_lea.sflag [#allocation7], %s591
          %s593 = sand.u32 %s70, 1
          %s594 = smul.addr %s593, 8
          %s595 = scalar_lea.vmem [#allocation8], %s594
          %596 = dma.done %s592, 128
        $region287: #{tpu_custom_call.1} parent=282 // pred_fallthru
          _
      $region283: #{tpu_custom_call.1} parent=5 // pred_fallthru
        _
    $region6: #{tpu_custom_call.1} parent=1 // loop_footer
      %s20 = sadd.s32 1, %s16
    $region7: #{tpu_custom_call.1} parent=1 // loop_footer_branch
      %15 = sbr.rel target = $region3
    $region8: #{tpu_custom_call.1} parent=1 // loop_exit
      _
    %597 = vsyncpa [#allocation6], 1
    %s598 = scalar_lea.sflag [#allocation6], 1
    %599 = vsyncpa %s598, 1
    %600 = vsyncpa [#allocation7], 1
    %s601 = scalar_lea.sflag [#allocation7], 1
    %602 = vsyncpa %s601, 1
  %603 = vsyncmov [#allocation2]
  %s604 = vpop.sfrf %603
  %p605 = scmp.eq.s32.totalorder %s604, 0
  %p606 = pneg %p605
  %608 = shalt.err (%p606)
  %s609 = scalar_lea.sflag [#allocation2], 1
  %610 = vsyncmov %s609
  %s611 = vpop.sfrf %610
  %p612 = scmp.eq.s32.totalorder %s611, 0
  %p613 = pneg %p612
  %615 = shalt.err (%p613)
  %s616 = scalar_lea.sflag [#allocation2], 2
  %617 = vsyncmov %s616
  %s618 = vpop.sfrf %617
  %p619 = scmp.eq.s32.totalorder %s618, 0
  %p620 = pneg %p619
  %622 = shalt.err (%p620)
  %s623 = scalar_lea.sflag [#allocation2], 3
  %624 = vsyncmov %s623
  %s625 = vpop.sfrf %624
  %p626 = scmp.eq.s32.totalorder %s625, 0
  %p627 = pneg %p626
  %629 = shalt.err (%p627)
  %s630 = scalar_lea.sflag [#allocation2], 4
  %631 = vsyncmov %s630
  %s632 = vpop.sfrf %631
  %p633 = scmp.eq.s32.totalorder %s632, 0
  %p634 = pneg %p633
  %636 = shalt.err (%p634)
  %s637 = scalar_lea.sflag [#allocation2], 5
  %638 = vsyncmov %s637
  %s639 = vpop.sfrf %638
  %p640 = scmp.eq.s32.totalorder %s639, 0
  %p641 = pneg %p640
  %643 = shalt.err (%p641)
  %s644 = scalar_lea.sflag [#allocation2], 6
  %645 = vsyncmov %s644
  %s646 = vpop.sfrf %645
  %p647 = scmp.eq.s32.totalorder %s646, 0
  %p648 = pneg %p647
  %650 = shalt.err (%p648)
  %s651 = scalar_lea.sflag [#allocation2], 7
  %652 = vsyncmov %s651
  %s653 = vpop.sfrf %652
  %p654 = scmp.eq.s32.totalorder %s653, 0
  %p655 = pneg %p654
  %657 = shalt.err (%p655)

</llo_original>
